<compile_context>
chip_gen: v6e
topology: v6e:2x2x1
jax: 0.10.0
libtpu: 0.0.40
codegen_flags: <defaults>
</compile_context>

<pallas_src>
import functools

import jax
import jax.numpy as jnp
import numpy as np
from jax.experimental import pallas as pl
from jax.experimental.pallas import tpu as pltpu


def gcn_kernel(x_ref, g_ref, w_ref, s_ref, out_ref, *, F, H, H2, O, L, N, B):
    # Load everything once; the layer loop is unrolled at trace time and only takes
    # static sublane slices of already-loaded values.
    a = g_ref[:N, :]            # [N, N]   bf16 normalized adjacency (with self loops)
    m = g_ref[N:N + B, :]       # [B, N]   bf16 row-normalized mean-pool membership
    w = w_ref[...]              # packed bf16 weights (BN scale folded into conv columns)
    s = s_ref[...]              # [L+2, H] f32: per-layer shifts, then classifier biases
    h = x_ref[...]              # [N, F]   bf16 node features

    off = 0
    for i in range(L):
        in_dim = F if i == 0 else H
        wi = w[off:off + in_dim, :]                             # [in_dim, H] bf16
        off += in_dim
        if in_dim < H:
            # (A @ h) @ W' : cheaper association when in_dim < H.
            ah = jnp.dot(a, h, preferred_element_type=jnp.float32)          # [N, in_dim]
            prop = jnp.dot(ah.astype(jnp.bfloat16), wi,
                           preferred_element_type=jnp.float32)              # [N, H]
        else:
            # A @ (h @ W') : cheaper (or equal) when in_dim >= H.
            xw = jnp.dot(h, wi, preferred_element_type=jnp.float32)         # [N, H]
            prop = jnp.dot(a, xw.astype(jnp.bfloat16),
                           preferred_element_type=jnp.float32)              # [N, H]
        # conv-bias + eval-BatchNorm already folded into (weight columns, shift).
        shift = s[i:i + 1, :]                                   # [1, H] f32
        h = jnp.maximum(prop + shift, 0.0).astype(jnp.bfloat16)  # ReLU; dropout=identity

    # global_mean_pool as a matmul with the row-normalized membership matrix.
    g_pool = jnp.dot(m, h, preferred_element_type=jnp.float32)  # [B, H] f32

    # classifier: Linear(H -> H2) + ReLU + Dropout(identity) + Linear(H2 -> O)
    c1 = w[off:off + H, :]      # [H, H]  bf16 (columns >= H2 are zero)
    off += H
    c2 = w[off:off + H, :]      # [H, H]  bf16 (only [:H2, :O] block nonzero)
    b1 = s[L:L + 1, :]          # [1, H]  f32 (entries >= H2 are zero)
    b2 = s[L + 1:L + 2, :]      # [1, H]  f32 (entries >= O are zero)

    z = jnp.maximum(
        jnp.dot(g_pool.astype(jnp.bfloat16), c1, preferred_element_type=jnp.float32) + b1,
        0.0)                                                    # [B, H]; cols >= H2 are 0
    out = jnp.dot(z.astype(jnp.bfloat16), c2,
                  preferred_element_type=jnp.float32) + b2      # [B, H]; cols >= O are 0
    out_ref[...] = out[:, :O].astype(out_ref.dtype)             # [B, O]


def gcn_forward(x, edge_index, batch, params, *, num_graphs, eps=1e-5):
    """Precompute dense graph operators, fold BN into weights, pack into slabs, call Pallas."""
    N, F = x.shape
    L = len(params["conv_w"])
    H = params["conv_w"][0].shape[1]
    H2 = params["cls_w1"].shape[1]
    O = params["cls_w2"].shape[1]
    B = num_graphs

    # Dense symmetric-normalized adjacency with self loops (PyG GCNConv normalization):
    # A[i, j] = 1 for edge j -> i; A_hat = A + I; A_norm = D^-1/2 A_hat D^-1/2.
    A = jnp.zeros((N, N), jnp.float32).at[edge_index[1], edge_index[0]].set(1.0)
    A = A + jnp.eye(N, dtype=jnp.float32)
    deg = jnp.sum(A, axis=1)
    dinv = jax.lax.rsqrt(deg)                                   # deg >= 1 (self loops)
    a_norm = dinv[:, None] * A * dinv[None, :]

    # Row-normalized membership matrix for global_mean_pool (1/count folded in).
    onehot = (batch[None, :] == jnp.arange(B, dtype=batch.dtype)[:, None]).astype(jnp.float32)
    counts = jnp.sum(onehot, axis=1, keepdims=True)
    m_mean = onehot / counts
    # NOTE: bf16 normalization coefficients carry ~3 significant digits; fine at the
    # current tolerance, keep these in f32 if tolerances ever tighten.
    graph_slab = jnp.concatenate([a_norm, m_mean], axis=0).astype(jnp.bfloat16)  # [N+B, N]

    # Fold eval-mode BatchNorm scale into conv weight columns; shift absorbs conv bias,
    # BN running mean and beta.  (Per-output-channel scale commutes with A_norm @ ..)
    w_rows, shift_rows = [], []
    for i in range(L):
        scale = params["bn_gamma"][i] / jnp.sqrt(params["bn_var"][i] + eps)   # [H]
        shift = params["bn_beta"][i] + scale * (params["conv_b"][i] - params["bn_mean"][i])
        w_rows.append(params["conv_w"][i] * scale[None, :])
        shift_rows.append(shift)

    # Classifier weights zero-padded to lane width H so the kernel never slices lanes.
    c1_pad = jnp.zeros((H, H), jnp.float32).at[:, :H2].set(params["cls_w1"])
    c2_pad = jnp.zeros((H, H), jnp.float32).at[:H2, :O].set(params["cls_w2"])
    w_slab = jnp.concatenate(w_rows + [c1_pad, c2_pad], axis=0).astype(jnp.bfloat16)

    b1_pad = jnp.zeros((H,), jnp.float32).at[:H2].set(params["cls_b1"])
    b2_pad = jnp.zeros((H,), jnp.float32).at[:O].set(params["cls_b2"])
    s_slab = jnp.stack(shift_rows + [b1_pad, b2_pad], axis=0).astype(jnp.float32)  # [L+2, H]

    x_bf16 = x.astype(jnp.bfloat16)

    # Advisory cost estimate for XLA scheduling around the custom call.
    flops = 0
    in_dim = F
    for _ in range(L):
        if in_dim < H:
            flops += 2 * (N * N * in_dim + N * in_dim * H)
        else:
            flops += 2 * (N * in_dim * H + N * N * H)
        in_dim = H
    flops += 2 * (B * N * H + B * H * H + B * H * H)            # pool + classifier
    bytes_accessed = (x_bf16.size * 2 + graph_slab.size * 2 + w_slab.size * 2
                      + s_slab.size * 4 + B * O * 4)
    cost = pl.CostEstimate(flops=flops, transcendentals=0, bytes_accessed=bytes_accessed)

    kernel = functools.partial(gcn_kernel, F=F, H=H, H2=H2, O=O, L=L, N=N, B=B)
    vmem = pl.BlockSpec(memory_space=pltpu.MemorySpace.VMEM)
    return pl.pallas_call(
        kernel,
        out_shape=jax.ShapeDtypeStruct((B, O), jnp.float32),
        in_specs=[vmem] * 4,
        out_specs=vmem,
        cost_estimate=cost,
    )(x_bf16, graph_slab, w_slab, s_slab)


def gcn_reference(x, edge_index, batch, params, *, num_graphs, eps=1e-5):
    """Pure-NumPy (f64) mirror of the PyTorch GCN forward (eval mode)."""
    xn = np.asarray(x, dtype=np.float64)
    ei = np.asarray(edge_index)
    bvec = np.asarray(batch)
    N = xn.shape[0]

    A = np.zeros((N, N), dtype=np.float64)
    A[ei[1], ei[0]] = 1.0
    A += np.eye(N)
    deg = A.sum(axis=1)
    dinv = deg ** -0.5
    a_norm = dinv[:, None] * A * dinv[None, :]

    def asnp(v):
        return [np.asarray(t, np.float64) for t in v] if isinstance(v, list) else np.asarray(v, np.float64)
    p = {k: asnp(v) for k, v in params.items()}

    h = xn
    for i in range(len(p["conv_w"])):
        h = a_norm @ (h @ p["conv_w"][i]) + p["conv_b"][i]
        scale = p["bn_gamma"][i] / np.sqrt(p["bn_var"][i] + eps)
        h = scale * (h - p["bn_mean"][i]) + p["bn_beta"][i]
        h = np.maximum(h, 0.0)

    g = np.stack([h[bvec == i].mean(axis=0) for i in range(num_graphs)])
    z = np.maximum(g @ p["cls_w1"] + p["cls_b1"], 0.0)
    return z @ p["cls_w2"] + p["cls_b2"]


if __name__ == "__main__":
    F, H, H2, O, L = 16, 32, 16, 1, 3        # node_features, hidden, hidden//2, output, layers
    N_PER, B = 8, 2                          # nodes per graph, graphs in batch
    N = N_PER * B

    key = jax.random.PRNGKey(0)
    ks = list(jax.random.split(key, 32))

    def rnd(shape, scale=0.1):
        return scale * jax.random.normal(ks.pop(), shape, dtype=jnp.float32)

    x = rnd((N, F))
    batch = jnp.array([0] * N_PER + [1] * N_PER, dtype=jnp.int32)

    # Ring graph inside each molecule, stored undirected (both directions).
    edges = []
    for g in range(B):
        base = N_PER * g
        for i in range(N_PER):
            j = (i + 1) % N_PER
            edges.append((base + i, base + j))
            edges.append((base + j, base + i))
    edge_index = jnp.asarray(np.array(edges, dtype=np.int32).T)   # [2, E]

    params = dict(
        conv_w=[rnd((F, H))] + [rnd((H, H)) for _ in range(L - 1)],   # pre-transposed [in, out]
        conv_b=[rnd((H,)) for _ in range(L)],
        bn_gamma=[1.0 + rnd((H,)) for _ in range(L)],
        bn_beta=[rnd((H,)) for _ in range(L)],
        bn_mean=[rnd((H,)) for _ in range(L)],
        bn_var=[1.0 + jnp.abs(rnd((H,))) for _ in range(L)],
        cls_w1=rnd((H, H2)), cls_b1=rnd((H2,)),
        cls_w2=rnd((H2, O)), cls_b2=rnd((O,)),
    )

    out = gcn_forward(x, edge_index, batch, params, num_graphs=B)
    out = jax.block_until_ready(out)

    ref = gcn_reference(x, edge_index, batch, params, num_graphs=B)
    assert out.shape == (B, O), out.shape
    assert np.allclose(np.asarray(out), np.asarray(ref), atol=1e-2, rtol=1e-1), (out, ref)

    print("KERNEL_OK")
</pallas_src>

<mosaic_0001>
module attributes {stable_mosaic.version = 11 : i64} {
  func.func @gcn_kernel(%arg0: memref<16x16xbf16, #tpu.memory_space<vmem>>, %arg1: memref<18x16xbf16, #tpu.memory_space<vmem>>, %arg2: memref<144x32xbf16, #tpu.memory_space<vmem>>, %arg3: memref<5x32xf32, #tpu.memory_space<vmem>>, %arg4: memref<2x1xf32, #tpu.memory_space<vmem>>) attributes {dimension_semantics = [], scalar_prefetch = 0 : i64, scratch_operands = 0 : i64, tpu.core_type = #tpu.core_type<tc>} {
    %c0 = arith.constant 0 : index
    %c0_0 = arith.constant 0 : index
    %0 = vector.load %arg1[%c0, %c0_0] : memref<18x16xbf16, #tpu.memory_space<vmem>>, vector<16x16xbf16>
    %c16 = arith.constant 16 : index
    %c0_1 = arith.constant 0 : index
    %1 = vector.load %arg1[%c16, %c0_1] : memref<18x16xbf16, #tpu.memory_space<vmem>>, vector<2x16xbf16>
    %c0_2 = arith.constant 0 : index
    %c0_3 = arith.constant 0 : index
    %2 = vector.load %arg2[%c0_2, %c0_3] : memref<144x32xbf16, #tpu.memory_space<vmem>>, vector<144x32xbf16>
    %c0_4 = arith.constant 0 : index
    %c0_5 = arith.constant 0 : index
    %3 = vector.load %arg3[%c0_4, %c0_5] : memref<5x32xf32, #tpu.memory_space<vmem>>, vector<5x32xf32>
    %c0_6 = arith.constant 0 : index
    %c0_7 = arith.constant 0 : index
    %4 = vector.load %arg0[%c0_6, %c0_7] : memref<16x16xbf16, #tpu.memory_space<vmem>>, vector<16x16xbf16>
    %5 = vector.extract_strided_slice %2 {offsets = [0, 0], sizes = [16, 32], strides = [1, 1]} : vector<144x32xbf16> to vector<16x32xbf16>
    %cst = arith.constant dense<0.000000e+00> : vector<16x16xf32>
    %6 = tpu.matmul %0, %4, %cst {dimension_numbers = #tpu.dot_dimension_numbers<[1], [0], [0], [1], [0, 0, 1, 1], [], []>} : vector<16x16xbf16>, vector<16x16xbf16>, vector<16x16xf32> -> vector<16x16xf32>
    %7 = arith.truncf %6 : vector<16x16xf32> to vector<16x16xbf16>
    %cst_8 = arith.constant dense<0.000000e+00> : vector<16x32xf32>
    %8 = tpu.matmul %7, %5, %cst_8 {dimension_numbers = #tpu.dot_dimension_numbers<[1], [0], [0], [1], [0, 0, 1, 1], [], []>} : vector<16x16xbf16>, vector<16x32xbf16>, vector<16x32xf32> -> vector<16x32xf32>
    %9 = vector.extract_strided_slice %3 {offsets = [0, 0], sizes = [1, 32], strides = [1, 1]} : vector<5x32xf32> to vector<1x32xf32>
    %10 = vector.broadcast %9 : vector<1x32xf32> to vector<16x32xf32>
    %11 = arith.addf %8, %10 : vector<16x32xf32>
    %cst_9 = arith.constant 0.000000e+00 : f32
    %12 = vector.broadcast %cst_9 : f32 to vector<16x32xf32>
    %13 = arith.maximumf %11, %12 : vector<16x32xf32>
    %14 = arith.truncf %13 : vector<16x32xf32> to vector<16x32xbf16>
    %15 = vector.extract_strided_slice %2 {offsets = [16, 0], sizes = [32, 32], strides = [1, 1]} : vector<144x32xbf16> to vector<32x32xbf16>
    %cst_10 = arith.constant dense<0.000000e+00> : vector<16x32xf32>
    %16 = tpu.matmul %14, %15, %cst_10 {dimension_numbers = #tpu.dot_dimension_numbers<[1], [0], [0], [1], [0, 0, 1, 1], [], []>} : vector<16x32xbf16>, vector<32x32xbf16>, vector<16x32xf32> -> vector<16x32xf32>
    %17 = arith.truncf %16 : vector<16x32xf32> to vector<16x32xbf16>
    %cst_11 = arith.constant dense<0.000000e+00> : vector<16x32xf32>
    %18 = tpu.matmul %0, %17, %cst_11 {dimension_numbers = #tpu.dot_dimension_numbers<[1], [0], [0], [1], [0, 0, 1, 1], [], []>} : vector<16x16xbf16>, vector<16x32xbf16>, vector<16x32xf32> -> vector<16x32xf32>
    %19 = vector.extract_strided_slice %3 {offsets = [1, 0], sizes = [1, 32], strides = [1, 1]} : vector<5x32xf32> to vector<1x32xf32>
    %20 = vector.broadcast %19 : vector<1x32xf32> to vector<16x32xf32>
    %21 = arith.addf %18, %20 : vector<16x32xf32>
    %cst_12 = arith.constant 0.000000e+00 : f32
    %22 = vector.broadcast %cst_12 : f32 to vector<16x32xf32>
    %23 = arith.maximumf %21, %22 : vector<16x32xf32>
    %24 = arith.truncf %23 : vector<16x32xf32> to vector<16x32xbf16>
    %25 = vector.extract_strided_slice %2 {offsets = [48, 0], sizes = [32, 32], strides = [1, 1]} : vector<144x32xbf16> to vector<32x32xbf16>
    %cst_13 = arith.constant dense<0.000000e+00> : vector<16x32xf32>
    %26 = tpu.matmul %24, %25, %cst_13 {dimension_numbers = #tpu.dot_dimension_numbers<[1], [0], [0], [1], [0, 0, 1, 1], [], []>} : vector<16x32xbf16>, vector<32x32xbf16>, vector<16x32xf32> -> vector<16x32xf32>
    %27 = arith.truncf %26 : vector<16x32xf32> to vector<16x32xbf16>
    %cst_14 = arith.constant dense<0.000000e+00> : vector<16x32xf32>
    %28 = tpu.matmul %0, %27, %cst_14 {dimension_numbers = #tpu.dot_dimension_numbers<[1], [0], [0], [1], [0, 0, 1, 1], [], []>} : vector<16x16xbf16>, vector<16x32xbf16>, vector<16x32xf32> -> vector<16x32xf32>
    %29 = vector.extract_strided_slice %3 {offsets = [2, 0], sizes = [1, 32], strides = [1, 1]} : vector<5x32xf32> to vector<1x32xf32>
    %30 = vector.broadcast %29 : vector<1x32xf32> to vector<16x32xf32>
    %31 = arith.addf %28, %30 : vector<16x32xf32>
    %cst_15 = arith.constant 0.000000e+00 : f32
    %32 = vector.broadcast %cst_15 : f32 to vector<16x32xf32>
    %33 = arith.maximumf %31, %32 : vector<16x32xf32>
    %34 = arith.truncf %33 : vector<16x32xf32> to vector<16x32xbf16>
    %cst_16 = arith.constant dense<0.000000e+00> : vector<2x32xf32>
    %35 = tpu.matmul %1, %34, %cst_16 {dimension_numbers = #tpu.dot_dimension_numbers<[1], [0], [0], [1], [0, 0, 1, 1], [], []>} : vector<2x16xbf16>, vector<16x32xbf16>, vector<2x32xf32> -> vector<2x32xf32>
    %36 = vector.extract_strided_slice %2 {offsets = [80, 0], sizes = [32, 32], strides = [1, 1]} : vector<144x32xbf16> to vector<32x32xbf16>
    %37 = vector.extract_strided_slice %2 {offsets = [112, 0], sizes = [32, 32], strides = [1, 1]} : vector<144x32xbf16> to vector<32x32xbf16>
    %38 = vector.extract_strided_slice %3 {offsets = [3, 0], sizes = [1, 32], strides = [1, 1]} : vector<5x32xf32> to vector<1x32xf32>
    %39 = vector.extract_strided_slice %3 {offsets = [4, 0], sizes = [1, 32], strides = [1, 1]} : vector<5x32xf32> to vector<1x32xf32>
    %40 = arith.truncf %35 : vector<2x32xf32> to vector<2x32xbf16>
    %cst_17 = arith.constant dense<0.000000e+00> : vector<2x32xf32>
    %41 = tpu.matmul %40, %36, %cst_17 {dimension_numbers = #tpu.dot_dimension_numbers<[1], [0], [0], [1], [0, 0, 1, 1], [], []>} : vector<2x32xbf16>, vector<32x32xbf16>, vector<2x32xf32> -> vector<2x32xf32>
    %42 = vector.broadcast %38 : vector<1x32xf32> to vector<2x32xf32>
    %43 = arith.addf %41, %42 : vector<2x32xf32>
    %cst_18 = arith.constant 0.000000e+00 : f32
    %44 = vector.broadcast %cst_18 : f32 to vector<2x32xf32>
    %45 = arith.maximumf %43, %44 : vector<2x32xf32>
    %46 = arith.truncf %45 : vector<2x32xf32> to vector<2x32xbf16>
    %cst_19 = arith.constant dense<0.000000e+00> : vector<2x32xf32>
    %47 = tpu.matmul %46, %37, %cst_19 {dimension_numbers = #tpu.dot_dimension_numbers<[1], [0], [0], [1], [0, 0, 1, 1], [], []>} : vector<2x32xbf16>, vector<32x32xbf16>, vector<2x32xf32> -> vector<2x32xf32>
    %48 = vector.broadcast %39 : vector<1x32xf32> to vector<2x32xf32>
    %49 = arith.addf %47, %48 : vector<2x32xf32>
    %50 = vector.extract_strided_slice %49 {offsets = [0, 0], sizes = [2, 1], strides = [1, 1]} : vector<2x32xf32> to vector<2x1xf32>
    %c0_20 = arith.constant 0 : index
    %c0_21 = arith.constant 0 : index
    %51 = vector.load %arg4[%c0_20, %c0_21] : memref<2x1xf32, #tpu.memory_space<vmem>>, vector<2x1xf32>
    tpu.vector_store %arg4[%c0_20, %c0_21], %50 {strides = array<i32>} : memref<2x1xf32, #tpu.memory_space<vmem>>, vector<2x1xf32>,
    return
  }
}

</mosaic_0001>

<llo_original>
// kernel: tpu_custom_call.1
$region0: #{tpu_custom_call.1}
  #allocation0 [shape = 'u32[]', space=smem, size = 0x4, offset = 0x4, fixed_abs, tag = 'smem constant byte address 0x4 - core index']
  #allocation1 [shape = 'u32[144,128]{1,0:T(1,128)}', space=vmem, size = 0x12000, scoped, tag = 'internal scratch']
  %s0 = inlined_call_operand.vmem [shape: bf16[16,16], index: 0, kind: input, shape index: {}]
  %s1 = inlined_call_operand.vmem [shape: bf16[18,16], index: 1, kind: input, shape index: {}]
  %s2 = inlined_call_operand.vmem [shape: bf16[144,32], index: 2, kind: input, shape index: {}]
  %s3 = inlined_call_operand.vmem [shape: f32[5,32], index: 3, kind: input, shape index: {}]
  %s4 = inlined_call_operand.vmem [shape: f32[2,1], index: 4, kind: output, shape index: {}]
  %s5 = sld [smem:[#allocation0]]
  $region26: #{tpu_custom_call.1} parent=0
    _
  %s7 = ssub.s32 1, %s5
  %s8 = scalar_select 0, %s7, %s5
  // Predicated region
  $region2: #{tpu_custom_call.1} parent=0 // pred_check
    _
  $region3: #{tpu_custom_call.1} parent=0 // pred_check_branch
    %10 = sbr.rel (0) target = $region5
  $region4: #{tpu_custom_call.1} parent=0 // pred_region
    _
  $region5: #{tpu_custom_call.1} parent=0 // pred_fallthru
    _
  // Predicated region
  $region6: #{tpu_custom_call.1} parent=0 // pred_check
    _
  $region7: #{tpu_custom_call.1} parent=0 // pred_check_branch
    %12 = sbr.rel (0) target = $region9
  $region8: #{tpu_custom_call.1} parent=0 // pred_region
    _
  $region9: #{tpu_custom_call.1} parent=0 // pred_fallthru
    _
  // Predicated region
  $region10: #{tpu_custom_call.1} parent=0 // pred_check
    _
  $region11: #{tpu_custom_call.1} parent=0 // pred_check_branch
    %14 = sbr.rel (0) target = $region13
  $region12: #{tpu_custom_call.1} parent=0 // pred_region
    _
  $region13: #{tpu_custom_call.1} parent=0 // pred_fallthru
    _
  // Predicated region
  $region14: #{tpu_custom_call.1} parent=0 // pred_check
    _
  $region15: #{tpu_custom_call.1} parent=0 // pred_check_branch
    %16 = sbr.rel (0) target = $region17
  $region16: #{tpu_custom_call.1} parent=0 // pred_region
    _
  $region17: #{tpu_custom_call.1} parent=0 // pred_fallthru
    _
  %v18 = vld [vmem:[%s1] sm:$0xf]
  %v19 = vld [vmem:[%s1 + $0x4] sm:$0xf]
  %v20 = vld [vmem:[%s1 + $0x8] sm:$0x1]
  %v21 = vld [vmem:[%s2] sm:$0xf]
  %v22 = vld [vmem:[%s2 + $0x4] sm:$0xf]
  %v23 = vld [vmem:[%s2 + $0x8] sm:$0xf]
  %v24 = vld [vmem:[%s2 + $0xc] sm:$0xf]
  %v25 = vld [vmem:[%s2 + $0x10] sm:$0xf]
  %v26 = vld [vmem:[%s2 + $0x14] sm:$0xf]
  %v27 = vld [vmem:[%s2 + $0x18] sm:$0xf]
  %v28 = vld [vmem:[%s2 + $0x1c] sm:$0xf]
  %v29 = vld [vmem:[%s2 + $0x20] sm:$0xf]
  %v30 = vld [vmem:[%s2 + $0x24] sm:$0xf]
  %v31 = vld [vmem:[%s2 + $0x28] sm:$0xf]
  %v32 = vld [vmem:[%s2 + $0x2c] sm:$0xf]
  %v33 = vld [vmem:[%s2 + $0x30] sm:$0xf]
  %v34 = vld [vmem:[%s2 + $0x34] sm:$0xf]
  %v35 = vld [vmem:[%s2 + $0x38] sm:$0xf]
  %v36 = vld [vmem:[%s2 + $0x3c] sm:$0xf]
  %v37 = vld [vmem:[%s2 + $0x40] sm:$0xf]
  %v38 = vld [vmem:[%s2 + $0x44] sm:$0xf]
  %v39 = vld [vmem:[%s3] sm:$0x1f]
  %v40 = vld [vmem:[%s0] sm:$0xf]
  %v41 = vld [vmem:[%s0 + $0x4] sm:$0xf]
  %v44 = vunpack.c.l.b16 %v18
  %v45 = vunpack.c.l.b16 %v19
  %v46 = vpack.c.b16 %v45, %v44
  %v49 = vunpack.c.l.b16 %v40
  %v50 = vunpack.c.l.b16 %v41
  %v51 = vpack.c.b16 %v50, %v49
  %vm53 = vcmask 130048
  %v55 = vsel %vm53, %v46, 0
  %57 = vmatprep.subr.bf16.mxu0 0
  %58 = vmatpush1.bf16.msra.mxu0 0
  %59 = vmatprep.subr.bf16.mxu0 0
  %60 = vmatpush1.bf16.msra.mxu0 0
  %61 = vmatprep.subr.bf16.mxu0 0
  %62 = vmatpush1.bf16.msra.mxu0 0
  %63 = vmatprep.subr.bf16.mxu0 0
  %64 = vmatpush1.bf16.msra.mxu0 0
  %65 = vmatprep.subr.bf16.mxu0 0
  %66 = vmatpush1.bf16.msra.mxu0 0
  %67 = vmatprep.subr.bf16.mxu0 0
  %68 = vmatpush1.bf16.msra.mxu0 0
  %69 = vmatprep.subr.bf16.mxu0 0
  %70 = vmatpush1.bf16.msra.mxu0 0
  %71 = vmatprep.subr.bf16.mxu0 0
  %72 = vmatpush1.bf16.msra.mxu0 %v51
  %73 = vmatprep.subr.bf16.mxu0 0
  %74 = vmatpush2.bf16.msra.mxu0 0
  %75 = vmatprep.subr.bf16.mxu0 0
  %76 = vmatpush2.bf16.msra.mxu0 0
  %77 = vmatprep.subr.bf16.mxu0 0
  %78 = vmatpush2.bf16.msra.mxu0 0
  %79 = vmatprep.subr.bf16.mxu0 0
  %80 = vmatpush2.bf16.msra.mxu0 0
  %81 = vmatprep.subr.bf16.mxu0 0
  %82 = vmatpush2.bf16.msra.mxu0 0
  %83 = vmatprep.subr.bf16.mxu0 0
  %84 = vmatpush2.bf16.msra.mxu0 0
  %85 = vmatprep.subr.bf16.mxu0 0
  %86 = vmatpush2.bf16.msra.mxu0 0
  %87 = vmatprep.subr.bf16.mxu0 0
  %88 = vmatpush2.bf16.msra.mxu0 0
  %89 = vmatprep.mubr.bf16.mxu0 0
  %90 = vmatmul.mubr.bf16.gmra.mxu0 %v55
  %v91 = vpop.f32.mrf.mxu0
  %v92 = vadd.f32 0.0, %v91
  %v93 = vpop.f32.mrf.mxu0
  %v94 = vpop.f32.mrf.mxu0
  %v95 = vadd.f32 0.0, %v94
  %v96 = vpop.f32.mrf.mxu0
  %97 = vdwg.mxu0
  %v98 = vpack.c.bf16 %v95, %v92
  %v99 = vlaneseq
  %v100 = vshrl.u32 %v99, 7
  %v101 = vsub.s32 0, %v100
  %v102 = vrot.slane %v39, %v101
  %v105 = vunpack.c.l.b16 %v21
  %v106 = vunpack.c.l.b16 %v22
  %v107 = vpack.c.b16 %v106, %v105
  %v110 = vsel %vm53, %v98, 0
  %112 = vmatprep.subr.bf16.mxu0 0
  %113 = vmatpush1.bf16.msra.mxu0 0
  %114 = vmatprep.subr.bf16.mxu0 0
  %115 = vmatpush1.bf16.msra.mxu0 0
  %116 = vmatprep.subr.bf16.mxu0 0
  %117 = vmatpush1.bf16.msra.mxu0 0
  %118 = vmatprep.subr.bf16.mxu0 0
  %119 = vmatpush1.bf16.msra.mxu0 0
  %120 = vmatprep.subr.bf16.mxu0 0
  %121 = vmatpush1.bf16.msra.mxu0 0
  %122 = vmatprep.subr.bf16.mxu0 0
  %123 = vmatpush1.bf16.msra.mxu0 0
  %124 = vmatprep.subr.bf16.mxu0 0
  %125 = vmatpush1.bf16.msra.mxu0 0
  %126 = vmatprep.subr.bf16.mxu0 0
  %127 = vmatpush1.bf16.msra.mxu0 %v107
  %128 = vmatprep.subr.bf16.mxu0 0
  %129 = vmatpush2.bf16.msra.mxu0 0
  %130 = vmatprep.subr.bf16.mxu0 0
  %131 = vmatpush2.bf16.msra.mxu0 0
  %132 = vmatprep.subr.bf16.mxu0 0
  %133 = vmatpush2.bf16.msra.mxu0 0
  %134 = vmatprep.subr.bf16.mxu0 0
  %135 = vmatpush2.bf16.msra.mxu0 0
  %136 = vmatprep.subr.bf16.mxu0 0
  %137 = vmatpush2.bf16.msra.mxu0 0
  %138 = vmatprep.subr.bf16.mxu0 0
  %139 = vmatpush2.bf16.msra.mxu0 0
  %140 = vmatprep.subr.bf16.mxu0 0
  %141 = vmatpush2.bf16.msra.mxu0 0
  %142 = vmatprep.subr.bf16.mxu0 0
  %143 = vmatpush2.bf16.msra.mxu0 0
  %144 = vmatprep.mubr.bf16.mxu0 0
  %145 = vmatmul.mubr.bf16.gmra.mxu0 %v110
  %v146 = vpop.f32.mrf.mxu0
  %v147 = vadd.f32 %v102, %v146
  %v148 = vpop.f32.mrf.mxu0
  %v149 = vpop.f32.mrf.mxu0
  %v150 = vadd.f32 %v102, %v149
  %v151 = vpop.f32.mrf.mxu0
  %152 = vdwg.mxu0
  %v153 = vmax.f32 %v147, 0.0
  %v154 = vmax.f32 %v150, 0.0
  %v155 = vpack.c.bf16 %v154, %v153
  %v160 = vunpack.c.l.b16 %v23
  %v161 = vunpack.c.l.b16 %v24
  %v162 = vunpack.c.l.b16 %v25
  %v163 = vunpack.c.l.b16 %v26
  %v164 = vpack.c.b16 %v161, %v160
  %v165 = vpack.c.b16 %v163, %v162
  %vm168 = vcmask 261120
  %v170 = vsel %vm168, %v155, 0
  %172 = vmatprep.subr.bf16.mxu0 0
  %173 = vmatpush1.bf16.msra.mxu0 0
  %174 = vmatprep.subr.bf16.mxu0 0
  %175 = vmatpush1.bf16.msra.mxu0 0
  %176 = vmatprep.subr.bf16.mxu0 0
  %177 = vmatpush1.bf16.msra.mxu0 0
  %178 = vmatprep.subr.bf16.mxu0 0
  %179 = vmatpush1.bf16.msra.mxu0 0
  %180 = vmatprep.subr.bf16.mxu0 0
  %181 = vmatpush1.bf16.msra.mxu0 0
  %182 = vmatprep.subr.bf16.mxu0 0
  %183 = vmatpush1.bf16.msra.mxu0 0
  %184 = vmatprep.subr.bf16.mxu0 0
  %185 = vmatpush1.bf16.msra.mxu0 %v165
  %186 = vmatprep.subr.bf16.mxu0 0
  %187 = vmatpush1.bf16.msra.mxu0 %v164
  %188 = vmatprep.subr.bf16.mxu0 0
  %189 = vmatpush2.bf16.msra.mxu0 0
  %190 = vmatprep.subr.bf16.mxu0 0
  %191 = vmatpush2.bf16.msra.mxu0 0
  %192 = vmatprep.subr.bf16.mxu0 0
  %193 = vmatpush2.bf16.msra.mxu0 0
  %194 = vmatprep.subr.bf16.mxu0 0
  %195 = vmatpush2.bf16.msra.mxu0 0
  %196 = vmatprep.subr.bf16.mxu0 0
  %197 = vmatpush2.bf16.msra.mxu0 0
  %198 = vmatprep.subr.bf16.mxu0 0
  %199 = vmatpush2.bf16.msra.mxu0 0
  %200 = vmatprep.subr.bf16.mxu0 0
  %201 = vmatpush2.bf16.msra.mxu0 0
  %202 = vmatprep.subr.bf16.mxu0 0
  %203 = vmatpush2.bf16.msra.mxu0 0
  %204 = vmatprep.mubr.bf16.mxu0 0
  %205 = vmatmul.mubr.bf16.gmra.mxu0 %v170
  %v206 = vpop.f32.mrf.mxu0
  %v207 = vadd.f32 0.0, %v206
  %v208 = vpop.f32.mrf.mxu0
  %v209 = vpop.f32.mrf.mxu0
  %v210 = vadd.f32 0.0, %v209
  %v211 = vpop.f32.mrf.mxu0
  %212 = vdwg.mxu0
  %v213 = vpack.c.bf16 %v210, %v207
  %v214 = vlaneseq
  %v215 = vshrl.u32 %v214, 7
  %v216 = vsub.s32 1, %v215
  %v217 = vrot.slane %v39, %v216
  %218 = vmatprep.subr.bf16.mxu0 0
  %219 = vmatpush1.bf16.msra.mxu0 0
  %220 = vmatprep.subr.bf16.mxu0 0
  %221 = vmatpush1.bf16.msra.mxu0 0
  %222 = vmatprep.subr.bf16.mxu0 0
  %223 = vmatpush1.bf16.msra.mxu0 0
  %224 = vmatprep.subr.bf16.mxu0 0
  %225 = vmatpush1.bf16.msra.mxu0 0
  %226 = vmatprep.subr.bf16.mxu0 0
  %227 = vmatpush1.bf16.msra.mxu0 0
  %228 = vmatprep.subr.bf16.mxu0 0
  %229 = vmatpush1.bf16.msra.mxu0 0
  %230 = vmatprep.subr.bf16.mxu0 0
  %231 = vmatpush1.bf16.msra.mxu0 0
  %232 = vmatprep.subr.bf16.mxu0 0
  %233 = vmatpush1.bf16.msra.mxu0 %v213
  %234 = vmatprep.subr.bf16.mxu0 0
  %235 = vmatpush2.bf16.msra.mxu0 0
  %236 = vmatprep.subr.bf16.mxu0 0
  %237 = vmatpush2.bf16.msra.mxu0 0
  %238 = vmatprep.subr.bf16.mxu0 0
  %239 = vmatpush2.bf16.msra.mxu0 0
  %240 = vmatprep.subr.bf16.mxu0 0
  %241 = vmatpush2.bf16.msra.mxu0 0
  %242 = vmatprep.subr.bf16.mxu0 0
  %243 = vmatpush2.bf16.msra.mxu0 0
  %244 = vmatprep.subr.bf16.mxu0 0
  %245 = vmatpush2.bf16.msra.mxu0 0
  %246 = vmatprep.subr.bf16.mxu0 0
  %247 = vmatpush2.bf16.msra.mxu0 0
  %248 = vmatprep.subr.bf16.mxu0 0
  %249 = vmatpush2.bf16.msra.mxu0 0
  %250 = vmatprep.mubr.bf16.mxu0 0
  %251 = vmatmul.mubr.bf16.gmra.mxu0 %v55
  %v252 = vpop.f32.mrf.mxu0
  %v253 = vadd.f32 %v217, %v252
  %v254 = vpop.f32.mrf.mxu0
  %v255 = vpop.f32.mrf.mxu0
  %v256 = vadd.f32 %v217, %v255
  %v257 = vpop.f32.mrf.mxu0
  %258 = vdwg.mxu0
  %v259 = vmax.f32 %v253, 0.0
  %v260 = vmax.f32 %v256, 0.0
  %v261 = vpack.c.bf16 %v260, %v259
  %v266 = vunpack.c.l.b16 %v27
  %v267 = vunpack.c.l.b16 %v28
  %v268 = vunpack.c.l.b16 %v29
  %v269 = vunpack.c.l.b16 %v30
  %v270 = vpack.c.b16 %v267, %v266
  %v271 = vpack.c.b16 %v269, %v268
  %v275 = vsel %vm168, %v261, 0
  %277 = vmatprep.subr.bf16.mxu0 0
  %278 = vmatpush1.bf16.msra.mxu0 0
  %279 = vmatprep.subr.bf16.mxu0 0
  %280 = vmatpush1.bf16.msra.mxu0 0
  %281 = vmatprep.subr.bf16.mxu0 0
  %282 = vmatpush1.bf16.msra.mxu0 0
  %283 = vmatprep.subr.bf16.mxu0 0
  %284 = vmatpush1.bf16.msra.mxu0 0
  %285 = vmatprep.subr.bf16.mxu0 0
  %286 = vmatpush1.bf16.msra.mxu0 0
  %287 = vmatprep.subr.bf16.mxu0 0
  %288 = vmatpush1.bf16.msra.mxu0 0
  %289 = vmatprep.subr.bf16.mxu0 0
  %290 = vmatpush1.bf16.msra.mxu0 %v271
  %291 = vmatprep.subr.bf16.mxu0 0
  %292 = vmatpush1.bf16.msra.mxu0 %v270
  %293 = vmatprep.subr.bf16.mxu0 0
  %294 = vmatpush2.bf16.msra.mxu0 0
  %295 = vmatprep.subr.bf16.mxu0 0
  %296 = vmatpush2.bf16.msra.mxu0 0
  %297 = vmatprep.subr.bf16.mxu0 0
  %298 = vmatpush2.bf16.msra.mxu0 0
  %299 = vmatprep.subr.bf16.mxu0 0
  %300 = vmatpush2.bf16.msra.mxu0 0
  %301 = vmatprep.subr.bf16.mxu0 0
  %302 = vmatpush2.bf16.msra.mxu0 0
  %303 = vmatprep.subr.bf16.mxu0 0
  %304 = vmatpush2.bf16.msra.mxu0 0
  %305 = vmatprep.subr.bf16.mxu0 0
  %306 = vmatpush2.bf16.msra.mxu0 0
  %307 = vmatprep.subr.bf16.mxu0 0
  %308 = vmatpush2.bf16.msra.mxu0 0
  %309 = vmatprep.mubr.bf16.mxu0 0
  %310 = vmatmul.mubr.bf16.gmra.mxu0 %v275
  %v311 = vpop.f32.mrf.mxu0
  %v312 = vadd.f32 0.0, %v311
  %v313 = vpop.f32.mrf.mxu0
  %v314 = vpop.f32.mrf.mxu0
  %v315 = vadd.f32 0.0, %v314
  %v316 = vpop.f32.mrf.mxu0
  %317 = vdwg.mxu0
  %v318 = vpack.c.bf16 %v315, %v312
  %v319 = vlaneseq
  %v320 = vshrl.u32 %v319, 7
  %v321 = vsub.s32 2, %v320
  %v322 = vrot.slane %v39, %v321
  %323 = vmatprep.subr.bf16.mxu0 0
  %324 = vmatpush1.bf16.msra.mxu0 0
  %325 = vmatprep.subr.bf16.mxu0 0
  %326 = vmatpush1.bf16.msra.mxu0 0
  %327 = vmatprep.subr.bf16.mxu0 0
  %328 = vmatpush1.bf16.msra.mxu0 0
  %329 = vmatprep.subr.bf16.mxu0 0
  %330 = vmatpush1.bf16.msra.mxu0 0
  %331 = vmatprep.subr.bf16.mxu0 0
  %332 = vmatpush1.bf16.msra.mxu0 0
  %333 = vmatprep.subr.bf16.mxu0 0
  %334 = vmatpush1.bf16.msra.mxu0 0
  %335 = vmatprep.subr.bf16.mxu0 0
  %336 = vmatpush1.bf16.msra.mxu0 0
  %337 = vmatprep.subr.bf16.mxu0 0
  %338 = vmatpush1.bf16.msra.mxu0 %v318
  %339 = vmatprep.subr.bf16.mxu0 0
  %340 = vmatpush2.bf16.msra.mxu0 0
  %341 = vmatprep.subr.bf16.mxu0 0
  %342 = vmatpush2.bf16.msra.mxu0 0
  %343 = vmatprep.subr.bf16.mxu0 0
  %344 = vmatpush2.bf16.msra.mxu0 0
  %345 = vmatprep.subr.bf16.mxu0 0
  %346 = vmatpush2.bf16.msra.mxu0 0
  %347 = vmatprep.subr.bf16.mxu0 0
  %348 = vmatpush2.bf16.msra.mxu0 0
  %349 = vmatprep.subr.bf16.mxu0 0
  %350 = vmatpush2.bf16.msra.mxu0 0
  %351 = vmatprep.subr.bf16.mxu0 0
  %352 = vmatpush2.bf16.msra.mxu0 0
  %353 = vmatprep.subr.bf16.mxu0 0
  %354 = vmatpush2.bf16.msra.mxu0 0
  %355 = vmatprep.mubr.bf16.mxu0 0
  %356 = vmatmul.mubr.bf16.gmra.mxu0 %v55
  %v357 = vpop.f32.mrf.mxu0
  %v358 = vadd.f32 %v322, %v357
  %v359 = vpop.f32.mrf.mxu0
  %v360 = vpop.f32.mrf.mxu0
  %v361 = vadd.f32 %v322, %v360
  %v362 = vpop.f32.mrf.mxu0
  %363 = vdwg.mxu0
  %v364 = vmax.f32 %v358, 0.0
  %v365 = vmax.f32 %v361, 0.0
  %v366 = vpack.c.bf16 %v365, %v364
  %v368 = vsel %vm53, %v20, 0
  %370 = vmatprep.subr.bf16.mxu0 0
  %371 = vmatpush1.bf16.msra.mxu0 0
  %372 = vmatprep.subr.bf16.mxu0 0
  %373 = vmatpush1.bf16.msra.mxu0 0
  %374 = vmatprep.subr.bf16.mxu0 0
  %375 = vmatpush1.bf16.msra.mxu0 0
  %376 = vmatprep.subr.bf16.mxu0 0
  %377 = vmatpush1.bf16.msra.mxu0 0
  %378 = vmatprep.subr.bf16.mxu0 0
  %379 = vmatpush1.bf16.msra.mxu0 0
  %380 = vmatprep.subr.bf16.mxu0 0
  %381 = vmatpush1.bf16.msra.mxu0 0
  %382 = vmatprep.subr.bf16.mxu0 0
  %383 = vmatpush1.bf16.msra.mxu0 0
  %384 = vmatprep.subr.bf16.mxu0 0
  %385 = vmatpush1.bf16.msra.mxu0 %v366
  %386 = vmatprep.subr.bf16.mxu0 0
  %387 = vmatpush2.bf16.msra.mxu0 0
  %388 = vmatprep.subr.bf16.mxu0 0
  %389 = vmatpush2.bf16.msra.mxu0 0
  %390 = vmatprep.subr.bf16.mxu0 0
  %391 = vmatpush2.bf16.msra.mxu0 0
  %392 = vmatprep.subr.bf16.mxu0 0
  %393 = vmatpush2.bf16.msra.mxu0 0
  %394 = vmatprep.subr.bf16.mxu0 0
  %395 = vmatpush2.bf16.msra.mxu0 0
  %396 = vmatprep.subr.bf16.mxu0 0
  %397 = vmatpush2.bf16.msra.mxu0 0
  %398 = vmatprep.subr.bf16.mxu0 0
  %399 = vmatpush2.bf16.msra.mxu0 0
  %400 = vmatprep.subr.bf16.mxu0 0
  %401 = vmatpush2.bf16.msra.mxu0 0
  %402 = vmatprep.mubr.bf16.mxu0 0
  %403 = vmatmul.mubr.bf16.gmra.mxu0 %v368
  %v404 = vpop.f32.mrf.mxu0
  %v405 = vadd.f32 0.0, %v404
  %v406 = vpop.f32.mrf.mxu0
  %v407 = vpop.f32.mrf.mxu0
  %v408 = vpop.f32.mrf.mxu0
  %409 = vdwg.mxu0
  %v410 = vpack.c.bf16 %v405, %v405
  %v411 = vlaneseq
  %v412 = vshrl.u32 %v411, 7
  %v413 = vsub.s32 3, %v412
  %v414 = vrot.slane %v39, %v413
  %v419 = vunpack.c.l.b16 %v31
  %v420 = vunpack.c.l.b16 %v32
  %v421 = vunpack.c.l.b16 %v33
  %v422 = vunpack.c.l.b16 %v34
  %v423 = vpack.c.b16 %v420, %v419
  %v424 = vpack.c.b16 %v422, %v421
  %v428 = vsel %vm168, %v410, 0
  %430 = vmatprep.subr.bf16.mxu0 0
  %431 = vmatpush1.bf16.msra.mxu0 0
  %432 = vmatprep.subr.bf16.mxu0 0
  %433 = vmatpush1.bf16.msra.mxu0 0
  %434 = vmatprep.subr.bf16.mxu0 0
  %435 = vmatpush1.bf16.msra.mxu0 0
  %436 = vmatprep.subr.bf16.mxu0 0
  %437 = vmatpush1.bf16.msra.mxu0 0
  %438 = vmatprep.subr.bf16.mxu0 0
  %439 = vmatpush1.bf16.msra.mxu0 0
  %440 = vmatprep.subr.bf16.mxu0 0
  %441 = vmatpush1.bf16.msra.mxu0 0
  %442 = vmatprep.subr.bf16.mxu0 0
  %443 = vmatpush1.bf16.msra.mxu0 %v424
  %444 = vmatprep.subr.bf16.mxu0 0
  %445 = vmatpush1.bf16.msra.mxu0 %v423
  %446 = vmatprep.subr.bf16.mxu0 0
  %447 = vmatpush2.bf16.msra.mxu0 0
  %448 = vmatprep.subr.bf16.mxu0 0
  %449 = vmatpush2.bf16.msra.mxu0 0
  %450 = vmatprep.subr.bf16.mxu0 0
  %451 = vmatpush2.bf16.msra.mxu0 0
  %452 = vmatprep.subr.bf16.mxu0 0
  %453 = vmatpush2.bf16.msra.mxu0 0
  %454 = vmatprep.subr.bf16.mxu0 0
  %455 = vmatpush2.bf16.msra.mxu0 0
  %456 = vmatprep.subr.bf16.mxu0 0
  %457 = vmatpush2.bf16.msra.mxu0 0
  %458 = vmatprep.subr.bf16.mxu0 0
  %459 = vmatpush2.bf16.msra.mxu0 0
  %460 = vmatprep.subr.bf16.mxu0 0
  %461 = vmatpush2.bf16.msra.mxu0 0
  %462 = vmatprep.mubr.bf16.mxu0 0
  %463 = vmatmul.mubr.bf16.gmra.mxu0 %v428
  %v464 = vpop.f32.mrf.mxu0
  %v465 = vadd.f32 %v414, %v464
  %v466 = vpop.f32.mrf.mxu0
  %v467 = vpop.f32.mrf.mxu0
  %v468 = vpop.f32.mrf.mxu0
  %469 = vdwg.mxu0
  %v470 = vmax.f32 %v465, 0.0
  %v471 = vpack.c.bf16 %v470, %v470
  %v472 = vlaneseq
  %v473 = vshrl.u32 %v472, 7
  %v474 = vsub.s32 4, %v473
  %v475 = vrot.slane %v39, %v474
  %v480 = vunpack.c.l.b16 %v35
  %v481 = vunpack.c.l.b16 %v36
  %v482 = vunpack.c.l.b16 %v37
  %v483 = vunpack.c.l.b16 %v38
  %v484 = vpack.c.b16 %v481, %v480
  %v485 = vpack.c.b16 %v483, %v482
  %v489 = vsel %vm168, %v471, 0
  %491 = vmatprep.subr.bf16.mxu0 0
  %492 = vmatpush1.bf16.msra.mxu0 0
  %493 = vmatprep.subr.bf16.mxu0 0
  %494 = vmatpush1.bf16.msra.mxu0 0
  %495 = vmatprep.subr.bf16.mxu0 0
  %496 = vmatpush1.bf16.msra.mxu0 0
  %497 = vmatprep.subr.bf16.mxu0 0
  %498 = vmatpush1.bf16.msra.mxu0 0
  %499 = vmatprep.subr.bf16.mxu0 0
  %500 = vmatpush1.bf16.msra.mxu0 0
  %501 = vmatprep.subr.bf16.mxu0 0
  %502 = vmatpush1.bf16.msra.mxu0 0
  %503 = vmatprep.subr.bf16.mxu0 0
  %504 = vmatpush1.bf16.msra.mxu0 %v485
  %505 = vmatprep.subr.bf16.mxu0 0
  %506 = vmatpush1.bf16.msra.mxu0 %v484
  %507 = vmatprep.subr.bf16.mxu0 0
  %508 = vmatpush2.bf16.msra.mxu0 0
  %509 = vmatprep.subr.bf16.mxu0 0
  %510 = vmatpush2.bf16.msra.mxu0 0
  %511 = vmatprep.subr.bf16.mxu0 0
  %512 = vmatpush2.bf16.msra.mxu0 0
  %513 = vmatprep.subr.bf16.mxu0 0
  %514 = vmatpush2.bf16.msra.mxu0 0
  %515 = vmatprep.subr.bf16.mxu0 0
  %516 = vmatpush2.bf16.msra.mxu0 0
  %517 = vmatprep.subr.bf16.mxu0 0
  %518 = vmatpush2.bf16.msra.mxu0 0
  %519 = vmatprep.subr.bf16.mxu0 0
  %520 = vmatpush2.bf16.msra.mxu0 0
  %521 = vmatprep.subr.bf16.mxu0 0
  %522 = vmatpush2.bf16.msra.mxu0 0
  %523 = vmatprep.mubr.bf16.mxu0 0
  %524 = vmatmul.mubr.bf16.gmra.mxu0 %v489
  %v525 = vpop.f32.mrf.mxu0
  %v526 = vadd.f32 %v475, %v525
  %v527 = vpop.f32.mrf.mxu0
  %v528 = vpop.f32.mrf.mxu0
  %v529 = vpop.f32.mrf.mxu0
  %530 = vdwg.mxu0
  %vm531 = vcmask 1024
  %532 = vst.msk [vmem:[%s4] sm:$0x3] %vm531, %v526
  // Predicated region
  $region18: #{tpu_custom_call.1} parent=0 // pred_check
    _
  $region19: #{tpu_custom_call.1} parent=0 // pred_check_branch
    %534 = sbr.rel (0) target = $region21
  $region20: #{tpu_custom_call.1} parent=0 // pred_region
    _
  $region21: #{tpu_custom_call.1} parent=0 // pred_fallthru
    _
  // Predicated region
  $region22: #{tpu_custom_call.1} parent=0 // pred_check
    _
  $region23: #{tpu_custom_call.1} parent=0 // pred_check_branch
    %536 = sbr.rel (0) target = $region25
  $region24: #{tpu_custom_call.1} parent=0 // pred_region
    _
  $region25: #{tpu_custom_call.1} parent=0 // pred_fallthru
    _

</llo_original>
